<compile_context>
chip_gen: v7x
topology: tpu7x:2x2x1
jax: 0.10.0
libtpu: 0.0.40
codegen_flags: <defaults>
</compile_context>

<pallas_src>
import functools

import jax
import jax.numpy as jnp
import numpy as np
from jax.experimental import pallas as pl
from jax.experimental.pallas import tpu as pltpu

EPS = 1e-5
_VMEM_LIMIT_BYTES = 32 * 1024 * 1024  # explicit scoped-VMEM budget (v5e default is 16 MiB)


# ---------------------------------------------------------------------------
# Kernels
# ---------------------------------------------------------------------------

def _conv_same_rows(h, band_ref, height, ksize):
    """KxK 'same' conv over the packed (rows, lanes) slab.

    K per-dh MXU matmuls: vertical taps are XLU sublane rotations
    (pltpu.roll) masked at image boundaries; horizontal taps + zero
    W-padding are baked into the banded weight matrices band_ref[dh].
    """
    M, L = h.shape
    pad = ksize // 2
    # Row index within each image; computed once per tile and reused by all taps.
    row_in_img = jax.lax.broadcasted_iota(jnp.int32, (M, L), 0) % height
    acc = None
    for dh in range(ksize):
        off = dh - pad
        if off == 0:
            shifted = h
        else:
            # shifted[r] = h[r + off]; rows whose vertical tap falls outside
            # the image (this also covers the roll wrap-around) are zeroed.
            valid = (row_in_img + off >= 0) & (row_in_img + off < height)
            shifted = jnp.where(valid, pltpu.roll(h, (-off) % M, axis=0), 0.0)
        term = jnp.dot(shifted.astype(band_ref.dtype), band_ref[dh],
                       preferred_element_type=jnp.float32)
        acc = term if acc is None else acc + term
    return acc


def _emit_stats(y, stats_ref):
    # Per-lane (sum, sum_sq) partials; the per-channel reduction is a tiny
    # XLA op between passes (avoids any in-kernel pool/unpool matmuls).
    s1 = jnp.sum(y, axis=0, keepdims=True)        # (1, L)
    s2 = jnp.sum(y * y, axis=0, keepdims=True)    # (1, L)
    stats_ref[0] = jnp.concatenate([s1, s2], axis=0)


def _conv_stats_kernel(x_ref, band_ref, y_ref, stats_ref, *, height, ksize):
    """Pass A: conv1 + BN1 partial statistics."""
    y = _conv_same_rows(x_ref[...], band_ref, height, ksize)
    y_ref[...] = y
    _emit_stats(y, stats_ref)


def _bn_relu_conv_stats_kernel(y1_ref, aff_ref, band_ref, y2_ref, stats_ref,
                               *, height, ksize):
    """Pass B: apply BN1 (per-lane affine), ReLU, conv2 + BN2 partial stats."""
    h = jnp.maximum(y1_ref[...] * aff_ref[0:1, :] + aff_ref[1:2, :], 0.0)
    y = _conv_same_rows(h, band_ref, height, ksize)
    y2_ref[...] = y
    _emit_stats(y, stats_ref)


def _bn_residual_kernel(y2_ref, x_ref, aff_ref, out_ref):
    """Pass C: apply BN2, add the residual, ReLU."""
    out_ref[...] = jnp.maximum(
        y2_ref[...] * aff_ref[0:1, :] + aff_ref[1:2, :] + x_ref[...],
        0.0).astype(out_ref.dtype)


# ---------------------------------------------------------------------------
# Wrapper-side helpers (layout packing, banded weights, BN stat folding)
# ---------------------------------------------------------------------------

def _choose_lane_pack(N, W, C):
    """Smallest image count P dividing N that makes P*W*C a multiple of 128
    (lane-dense stores / full vregs); falls back to 1 (still correct)."""
    for p in range(1, N + 1):
        if N % p == 0 and (p * W * C) % 128 == 0:
            return p
    return 1


def _pack_nhwc(x, lane_pack):
    # NHWC -> (rows, lanes) with rows = (N/P)*H, lanes = P*W*C (channel fastest).
    # For production the packed layout should be the steady-state activation
    # layout between blocks; this single transpose exists for NHWC parity.
    N, H, W, C = x.shape
    G = N // lane_pack
    if lane_pack == 1:
        return x.reshape(N * H, W * C)
    return (x.reshape(G, lane_pack, H, W, C)
             .transpose(0, 2, 1, 3, 4)
             .reshape(G * H, lane_pack * W * C))


def _unpack_nhwc(xp, N, H, W, C, lane_pack):
    G = N // lane_pack
    if lane_pack == 1:
        return xp.reshape(N, H, W, C)
    return (xp.reshape(G, H, lane_pack, W, C)
              .transpose(0, 2, 1, 3, 4)
              .reshape(N, H, W, C))


def _band_matrices(w_hwio, W, lane_pack):
    """Fold the horizontal taps of a KxK 'same' conv (zero padded along W)
    into K banded (lanes, lanes) matrices for the packed (p*W*C + w*C + c)
    lane layout.  Band dh is applied to the input rows shifted by dh-pad."""
    w = np.asarray(w_hwio, np.float32)          # (K, K, Cin, Cout)
    K, _, Ci, Co = w.shape
    pad = K // 2
    img = np.zeros((K, W * Ci, W * Co), np.float32)
    for dh in range(K):
        for dw in range(K):
            off = dw - pad
            for wo in range(W):
                wi = wo + off
                if 0 <= wi < W:
                    img[dh, wi * Ci:(wi + 1) * Ci, wo * Co:(wo + 1) * Co] = w[dh, dw]
    # Block-diagonal over the lane-packed images (no cross-image mixing).
    B = np.zeros((K, lane_pack * W * Ci, lane_pack * W * Co), np.float32)
    for p in range(lane_pack):
        B[:, p * W * Ci:(p + 1) * W * Ci, p * W * Co:(p + 1) * W * Co] = img
    return jnp.asarray(B)


def _stats_to_affine(stats, gamma, beta, count, lane_rep):
    """Reduce per-tile per-lane (sum, sum_sq) partials to per-channel BN stats
    and fold gamma/beta into a per-lane (2, L) [scale; shift] operand."""
    C = gamma.shape[0]
    s = jnp.sum(stats, axis=0)                    # (2, L)
    s_c = s.reshape(2, lane_rep, C).sum(axis=1)   # (2, C)
    mean = s_c[0] / count
    # Single-pass E[x^2] - mean^2 (biased variance, training-mode BN).
    # TODO(synk): switch to a centered / Welford reduction if activations ever
    # have large means or the statistics path moves to bf16.
    var = s_c[1] / count - mean * mean
    scale = gamma * jax.lax.rsqrt(var + EPS)
    shift = beta - mean * scale
    return jnp.concatenate([jnp.tile(scale, lane_rep)[None, :],
                            jnp.tile(shift, lane_rep)[None, :]], axis=0)


def _auto_groups_per_tile(G, H, target_rows=512):
    # Target ~512 rows per tile so the matmul M-dim fills the MXU (256-wide
    # on v6e/v7x, 128 on v5e) while staying well inside the scoped VMEM budget.
    best = 1
    for gpt in range(1, G + 1):
        if G % gpt == 0 and gpt * H <= max(target_rows, H):
            best = gpt
    return best


# ---------------------------------------------------------------------------
# Packed-layout core (no layout ops) and NHWC convenience wrapper
# ---------------------------------------------------------------------------

def _residual_block_packed(xp, band1, band2, g1, be1, g2, be2, *,
                           img_h, img_w, chans, lane_pack, ksize,
                           groups_per_tile=None):
    rows, L = xp.shape
    H, K = img_h, ksize
    G = rows // H                        # packed image groups
    lane_rep = lane_pack * img_w         # lanes per channel
    count = float(rows * lane_rep)       # BN sample count per channel = N*H*W

    if groups_per_tile is None:
        groups_per_tile = _auto_groups_per_tile(G, H)
    if G % groups_per_tile != 0:
        groups_per_tile = G
    R = groups_per_tile * H              # rows per tile (whole images -> no halo)
    if R % 8 != 0 and R != rows:         # keep BlockSpec sublane-legal
        groups_per_tile, R = G, rows
    T = G // groups_per_tile

    cparams = pltpu.CompilerParams(
        dimension_semantics=("parallel",),
        vmem_limit_bytes=_VMEM_LIMIT_BYTES)

    row_spec = pl.BlockSpec((R, L), lambda t: (t, 0))
    band_spec = pl.BlockSpec((K, L, L), lambda t: (0, 0, 0))   # resident across tiles
    aff_spec = pl.BlockSpec((2, L), lambda t: (0, 0))
    stat_spec = pl.BlockSpec((1, 2, L), lambda t: (t, 0, 0))
    slab_shape = jax.ShapeDtypeStruct((rows, L), jnp.float32)
    stats_shape = jax.ShapeDtypeStruct((T, 2, L), jnp.float32)

    # Pass A: conv1 + per-tile BN1 partial statistics.
    y1, st1 = pl.pallas_call(
        functools.partial(_conv_stats_kernel, height=H, ksize=K),
        out_shape=(slab_shape, stats_shape),
        grid=(T,),
        in_specs=[row_spec, band_spec],
        out_specs=(row_spec, stat_spec),
        compiler_params=cparams,
    )(xp, band1)
    aff1 = _stats_to_affine(st1, g1, be1, count, lane_rep)

    # Pass B: BN1-apply + ReLU + conv2 + per-tile BN2 partial statistics.
    y2, st2 = pl.pallas_call(
        functools.partial(_bn_relu_conv_stats_kernel, height=H, ksize=K),
        out_shape=(slab_shape, stats_shape),
        grid=(T,),
        in_specs=[row_spec, aff_spec, band_spec],
        out_specs=(row_spec, stat_spec),
        compiler_params=cparams,
    )(y1, aff1, band2)
    aff2 = _stats_to_affine(st2, g2, be2, count, lane_rep)

    # Pass C: BN2-apply + residual add + ReLU.
    return pl.pallas_call(
        _bn_residual_kernel,
        out_shape=slab_shape,
        grid=(T,),
        in_specs=[row_spec, row_spec, aff_spec],
        out_specs=row_spec,
        compiler_params=cparams,
    )(y2, xp, aff2)


def residual_block_nhwc(x, w1_hwio, b1, g1, be1, w2_hwio, b2, g2, be2, *,
                        groups_per_tile=None, use_bf16=None):
    """ResidualBlock forward (training-mode BatchNorm) on NHWC float32 input.

    Conv biases b1/b2 are accepted for interface parity with nn.Conv2d but are
    mathematically cancelled by the training-mode BatchNorm mean subtraction,
    so they never reach the kernels.
    """
    del b1, b2
    N, H, W, C = x.shape
    K = w1_hwio.shape[0]
    P = _choose_lane_pack(N, W, C)
    if use_bf16 is None:
        use_bf16 = C >= 32   # bf16 MXU path for real channel counts; f32 at toy scale

    xp = _pack_nhwc(x, P)
    band1 = _band_matrices(w1_hwio, W, P)
    band2 = _band_matrices(w2_hwio, W, P)
    if use_bf16:
        band1 = band1.astype(jnp.bfloat16)
        band2 = band2.astype(jnp.bfloat16)

    outp = _residual_block_packed(
        xp, band1, band2, g1, be1, g2, be2,
        img_h=H, img_w=W, chans=C, lane_pack=P, ksize=K,
        groups_per_tile=groups_per_tile)
    return _unpack_nhwc(outp, N, H, W, C, P)


# ---------------------------------------------------------------------------
# Plain-JAX reference (PyTorch semantics, NHWC) and self-test
# ---------------------------------------------------------------------------

def _reference_nhwc(x, w1_hwio, b1, g1, be1, w2_hwio, b2, g2, be2):
    def conv(h, w, b):
        y = jax.lax.conv_general_dilated(
            h, w, window_strides=(1, 1), padding='SAME',
            dimension_numbers=('NHWC', 'HWIO', 'NHWC'))
        return y + b.reshape(1, 1, 1, -1)

    def bn(h, g, be):
        mean = h.mean(axis=(0, 1, 2), keepdims=True)
        var = ((h - mean) ** 2).mean(axis=(0, 1, 2), keepdims=True)   # biased
        return (h - mean) * jax.lax.rsqrt(var + EPS) * g.reshape(1, 1, 1, -1) \
               + be.reshape(1, 1, 1, -1)

    h = jnp.maximum(bn(conv(x, w1_hwio, b1), g1, be1), 0.0)
    h = bn(conv(h, w2_hwio, b2), g2, be2)
    return jnp.maximum(h + x, 0.0)


if __name__ == "__main__":
    N, C, H, W, K = 4, 4, 16, 16, 3
    key = jax.random.PRNGKey(0)
    kx, kw1, kb1, kw2, kb2 = jax.random.split(key, 5)

    x = jax.random.normal(kx, (N, H, W, C), jnp.float32)          # NHWC

    # Parameter shapes follow nn.Conv2d / nn.BatchNorm2d (fresh module:
    # BN weight = 1, BN bias = 0, training mode).  Conv weights in HWIO.
    w1_hwio = jax.random.normal(kw1, (K, K, C, C), jnp.float32) * 0.1
    b1 = jax.random.normal(kb1, (C,), jnp.float32) * 0.05
    w2_hwio = jax.random.normal(kw2, (K, K, C, C), jnp.float32) * 0.1
    b2 = jax.random.normal(kb2, (C,), jnp.float32) * 0.05
    g1 = jnp.ones((C,), jnp.float32)
    be1 = jnp.zeros((C,), jnp.float32)
    g2 = jnp.ones((C,), jnp.float32)
    be2 = jnp.zeros((C,), jnp.float32)

    # groups_per_tile=1 forces a multi-tile grid (2 tiles here) so the
    # pipelined row-tiling and the cross-tile BN stats reduction are exercised.
    out = residual_block_nhwc(x, w1_hwio, b1, g1, be1, w2_hwio, b2, g2, be2,
                              groups_per_tile=1)
    out = jax.block_until_ready(out)

    ref = _reference_nhwc(x, w1_hwio, b1, g1, be1, w2_hwio, b2, g2, be2)
    assert out.shape == x.shape
    max_err = float(jnp.max(jnp.abs(out - ref)))
    assert jnp.allclose(out, ref, atol=5e-4, rtol=5e-4), f"max err {max_err}"

    print("KERNEL_OK")
</pallas_src>

<mosaic_0001>
module attributes {stable_mosaic.version = 11 : i64} {
  func.func @_conv_stats_kernel(%arg0: i32, %arg1: memref<16x128xf32, #tpu.memory_space<vmem>>, %arg2: memref<3x128x128xf32, #tpu.memory_space<vmem>>, %arg3: memref<16x128xf32, #tpu.memory_space<vmem>>, %arg4: memref<1x2x128xf32, #tpu.memory_space<vmem>>) attributes {dimension_semantics = [#tpu.dimension_semantics<parallel>], iteration_bounds = array<i64: 2>, scalar_prefetch = 0 : i64, scratch_operands = 0 : i64, tpu.core_type = #tpu.core_type<tc>, window_params = [{transform_indices = @transform_0, window_bounds = array<i64: 16, 128>}, {pipeline_mode = #tpu.pipeline_mode<synchronous>, transform_indices = @transform_1, window_bounds = array<i64: 3, 128, 128>}, {transform_indices = @transform_2, window_bounds = array<i64: 16, 128>}, {transform_indices = @transform_3, window_bounds = array<i64: 1, 2, 128>}]} {
    %c0 = arith.constant 0 : index
    %c0_0 = arith.constant 0 : index
    %0 = vector.load %arg1[%c0, %c0_0] : memref<16x128xf32, #tpu.memory_space<vmem>>, vector<16x128xf32>
    %1 = tpu.iota {dimensions = array<i32: 0>} : vector<16x128xi32>
    %c16_i32 = arith.constant 16 : i32
    %c0_i32 = arith.constant 0 : i32
    %2 = arith.cmpi eq, %c16_i32, %c0_i32 : i32
    %c1_i32 = arith.constant 1 : i32
    %3 = arith.select %2, %c1_i32, %c16_i32 : i32
    %4 = vector.broadcast %3 : i32 to vector<16x128xi32>
    %5 = arith.remsi %1, %4 : vector<16x128xi32>
    %c0_i32_1 = arith.constant 0 : i32
    %6 = vector.broadcast %c0_i32_1 : i32 to vector<16x128xi32>
    %7 = arith.cmpi ne, %5, %6 : vector<16x128xi32>
    %c0_i32_2 = arith.constant 0 : i32
    %8 = vector.broadcast %c0_i32_2 : i32 to vector<16x128xi32>
    %9 = arith.cmpi slt, %5, %8 : vector<16x128xi32>
    %c0_i32_3 = arith.constant 0 : i32
    %10 = arith.cmpi slt, %3, %c0_i32_3 : i32
    %11 = vector.broadcast %10 : i1 to vector<16x128xi1>
    %12 = vector.broadcast %11 : vector<16x128xi1> to vector<16x128xi1>
    %13 = arith.xori %9, %12 : vector<16x128xi1>
    %14 = arith.andi %13, %7 : vector<16x128xi1>
    %15 = vector.broadcast %3 : i32 to vector<16x128xi32>
    %16 = arith.addi %5, %15 : vector<16x128xi32>
    %17 = arith.select %14, %16, %5 : vector<16x128xi1>, vector<16x128xi32>
    %c-1_i32 = arith.constant -1 : i32
    %18 = vector.broadcast %c-1_i32 : i32 to vector<16x128xi32>
    %19 = arith.addi %17, %18 : vector<16x128xi32>
    %c0_i32_4 = arith.constant 0 : i32
    %20 = vector.broadcast %c0_i32_4 : i32 to vector<16x128xi32>
    %21 = arith.cmpi sge, %19, %20 : vector<16x128xi32>
    %c-1_i32_5 = arith.constant -1 : i32
    %22 = vector.broadcast %c-1_i32_5 : i32 to vector<16x128xi32>
    %23 = arith.addi %17, %22 : vector<16x128xi32>
    %c16_i32_6 = arith.constant 16 : i32
    %24 = vector.broadcast %c16_i32_6 : i32 to vector<16x128xi32>
    %25 = arith.cmpi slt, %23, %24 : vector<16x128xi32>
    %26 = arith.andi %21, %25 : vector<16x128xi1>
    %c1_i32_7 = arith.constant 1 : i32
    %27 = tpu.dynamic_rotate %0 by %c1_i32_7 dim 0 : vector<16x128xf32>, i32 -> vector<16x128xf32>
    %cst = arith.constant 0.000000e+00 : f32
    %28 = vector.broadcast %cst : f32 to vector<16x128xf32>
    %29 = arith.select %26, %27, %28 : vector<16x128xi1>, vector<16x128xf32>
    %c0_8 = arith.constant 0 : index
    %c0_9 = arith.constant 0 : index
    %c0_10 = arith.constant 0 : index
    %30 = vector.load %arg2[%c0_8, %c0_9, %c0_10] : memref<3x128x128xf32, #tpu.memory_space<vmem>>, vector<1x128x128xf32>
    %31 = vector.shape_cast %30 : vector<1x128x128xf32> to vector<128x128xf32>
    %cst_11 = arith.constant dense<0.000000e+00> : vector<16x128xf32>
    %32 = tpu.matmul %29, %31, %cst_11 {dimension_numbers = #tpu.dot_dimension_numbers<[1], [0], [0], [1], [0, 0, 1, 1], [], []>} : vector<16x128xf32>, vector<128x128xf32>, vector<16x128xf32> -> vector<16x128xf32>
    %c1 = arith.constant 1 : index
    %c0_12 = arith.constant 0 : index
    %c0_13 = arith.constant 0 : index
    %33 = vector.load %arg2[%c1, %c0_12, %c0_13] : memref<3x128x128xf32, #tpu.memory_space<vmem>>, vector<1x128x128xf32>
    %34 = vector.shape_cast %33 : vector<1x128x128xf32> to vector<128x128xf32>
    %cst_14 = arith.constant dense<0.000000e+00> : vector<16x128xf32>
    %35 = tpu.matmul %0, %34, %cst_14 {dimension_numbers = #tpu.dot_dimension_numbers<[1], [0], [0], [1], [0, 0, 1, 1], [], []>} : vector<16x128xf32>, vector<128x128xf32>, vector<16x128xf32> -> vector<16x128xf32>
    %36 = arith.addf %32, %35 : vector<16x128xf32>
    %c1_i32_15 = arith.constant 1 : i32
    %37 = vector.broadcast %c1_i32_15 : i32 to vector<16x128xi32>
    %38 = arith.addi %17, %37 : vector<16x128xi32>
    %c0_i32_16 = arith.constant 0 : i32
    %39 = vector.broadcast %c0_i32_16 : i32 to vector<16x128xi32>
    %40 = arith.cmpi sge, %38, %39 : vector<16x128xi32>
    %c1_i32_17 = arith.constant 1 : i32
    %41 = vector.broadcast %c1_i32_17 : i32 to vector<16x128xi32>
    %42 = arith.addi %17, %41 : vector<16x128xi32>
    %c16_i32_18 = arith.constant 16 : i32
    %43 = vector.broadcast %c16_i32_18 : i32 to vector<16x128xi32>
    %44 = arith.cmpi slt, %42, %43 : vector<16x128xi32>
    %45 = arith.andi %40, %44 : vector<16x128xi1>
    %c15_i32 = arith.constant 15 : i32
    %46 = tpu.dynamic_rotate %0 by %c15_i32 dim 0 : vector<16x128xf32>, i32 -> vector<16x128xf32>
    %cst_19 = arith.constant 0.000000e+00 : f32
    %47 = vector.broadcast %cst_19 : f32 to vector<16x128xf32>
    %48 = arith.select %45, %46, %47 : vector<16x128xi1>, vector<16x128xf32>
    %c2 = arith.constant 2 : index
    %c0_20 = arith.constant 0 : index
    %c0_21 = arith.constant 0 : index
    %49 = vector.load %arg2[%c2, %c0_20, %c0_21] : memref<3x128x128xf32, #tpu.memory_space<vmem>>, vector<1x128x128xf32>
    %50 = vector.shape_cast %49 : vector<1x128x128xf32> to vector<128x128xf32>
    %cst_22 = arith.constant dense<0.000000e+00> : vector<16x128xf32>
    %51 = tpu.matmul %48, %50, %cst_22 {dimension_numbers = #tpu.dot_dimension_numbers<[1], [0], [0], [1], [0, 0, 1, 1], [], []>} : vector<16x128xf32>, vector<128x128xf32>, vector<16x128xf32> -> vector<16x128xf32>
    %52 = arith.addf %36, %51 : vector<16x128xf32>
    %c0_23 = arith.constant 0 : index
    %c0_24 = arith.constant 0 : index
    %53 = vector.load %arg3[%c0_23, %c0_24] : memref<16x128xf32, #tpu.memory_space<vmem>>, vector<16x128xf32>
    tpu.vector_store %arg3[%c0_23, %c0_24], %52 {strides = array<i32>} : memref<16x128xf32, #tpu.memory_space<vmem>>, vector<16x128xf32>,
    %cst_25 = arith.constant dense<0.000000e+00> : vector<128xf32>
    %54 = vector.multi_reduction <add>, %52, %cst_25 [0] : vector<16x128xf32> to vector<128xf32>
    %55 = vector.shape_cast %54 : vector<128xf32> to vector<1x128xf32>
    %56 = arith.mulf %52, %52 : vector<16x128xf32>
    %cst_26 = arith.constant dense<0.000000e+00> : vector<128xf32>
    %57 = vector.multi_reduction <add>, %56, %cst_26 [0] : vector<16x128xf32> to vector<128xf32>
    %58 = vector.shape_cast %57 : vector<128xf32> to vector<1x128xf32>
    %59 = tpu.concatenate %55, %58 in 0 : vector<1x128xf32>, vector<1x128xf32> -> vector<2x128xf32>
    %c0_27 = arith.constant 0 : index
    %c0_28 = arith.constant 0 : index
    %c0_29 = arith.constant 0 : index
    %60 = vector.load %arg4[%c0_27, %c0_28, %c0_29] : memref<1x2x128xf32, #tpu.memory_space<vmem>>, vector<1x2x128xf32>
    %61 = vector.shape_cast %60 : vector<1x2x128xf32> to vector<2x128xf32>
    %62 = vector.shape_cast %59 : vector<2x128xf32> to vector<1x2x128xf32>
    tpu.vector_store %arg4[%c0_27, %c0_28, %c0_29], %62 {strides = array<i32>} : memref<1x2x128xf32, #tpu.memory_space<vmem>>, vector<1x2x128xf32>,
    return
  }
  func.func @transform_0(%arg0: i32) -> (i32, i32) {
    %c0_i32 = arith.constant 0 : i32
    %c0_i32_0 = arith.constant 0 : i32
    return %arg0, %c0_i32 : i32, i32
  }
  func.func @transform_1(%arg0: i32) -> (i32, i32, i32) {
    %c0_i32 = arith.constant 0 : i32
    %c0_i32_0 = arith.constant 0 : i32
    %c0_i32_1 = arith.constant 0 : i32
    %c0_i32_2 = arith.constant 0 : i32
    return %c0_i32, %c0_i32_0, %c0_i32_1 : i32, i32, i32
  }
  func.func @transform_2(%arg0: i32) -> (i32, i32) {
    %c0_i32 = arith.constant 0 : i32
    %c0_i32_0 = arith.constant 0 : i32
    return %arg0, %c0_i32 : i32, i32
  }
  func.func @transform_3(%arg0: i32) -> (i32, i32, i32) {
    %c0_i32 = arith.constant 0 : i32
    %c0_i32_0 = arith.constant 0 : i32
    %c0_i32_1 = arith.constant 0 : i32
    return %arg0, %c0_i32, %c0_i32_0 : i32, i32, i32
  }
}

</mosaic_0001>

<llo_original>
// kernel: tpu_custom_call.1
$region0: #{tpu_custom_call.1}
  #allocation0 [shape = 'u32[]', space=smem, size = 0x4, offset = 0x4, fixed_abs, tag = 'smem constant byte address 0x4 - core index']
  #allocation1 [shape = 'u32[144,128]{1,0:T(1,128)}', space=vmem, size = 0x12000, scoped, tag = 'internal scratch']
  %s0 = inlined_call_operand.hbm [shape: f32[32,128], index: 0, kind: input, shape index: {}]
  %s1 = inlined_call_operand.hbm [shape: f32[3,128,128], index: 1, kind: input, shape index: {}]
  %s2 = inlined_call_operand.hbm [shape: f32[32,128], index: 2, kind: output, shape index: {0}]
  %s3 = inlined_call_operand.hbm [shape: f32[2,2,128], index: 3, kind: output, shape index: {1}]
  %4 = xla_tuple %s2, %s3
  %s5 = sld [smem:[#allocation0]]
  $region57: #{tpu_custom_call.1} parent=0
    _
  %s7 = ssub.s32 1, %s5
  %s8 = scalar_select 0, %s7, %s5
  $region1: #{tpu_custom_call.1} parent=0
    #allocation2 [shape = 'u8[16384]{0}', space=vmem, size = 0x4000, scoped, tag = 'input window, operand 0']
    #allocation3 [shape = 's32[2]{0}', space=sflag, size = 0x8, scoped, tag = 'scoped memory for tpu_custom_call.1']
    #allocation4 [shape = 's32[2]{0}', space=sflag, size = 0x8, scoped, tag = 'scoped memory for tpu_custom_call.1']
    #allocation5 [shape = 'u8[196608]{0}', space=vmem, size = 0x30000, scoped, tag = 'input window, operand 1, single buffered']
    #allocation6 [shape = 's32[1]{0}', space=sflag, size = 0x4, scoped, tag = 'scoped memory for tpu_custom_call.1']
    #allocation7 [shape = 'u8[16384]{0}', space=vmem, size = 0x4000, scoped, tag = 'output window, operand 0']
    #allocation8 [shape = 'u8[2048]{0}', space=vmem, size = 0x800, scoped, tag = 'output window, operand 1']
    #allocation9 [shape = 's32[2]{0}', space=sflag, size = 0x8, scoped, tag = 'scoped memory for tpu_custom_call.1']
    %9 = vsyncpa [#allocation3], 0
    %s10 = scalar_lea.sflag [#allocation3], 1
    %11 = vsyncpa %s10, 0
    %12 = vsyncpa [#allocation6], 0
    %13 = vsyncpa [#allocation4], 0
    %s14 = scalar_lea.sflag [#allocation4], 1
    %15 = vsyncpa %s14, 0
    %16 = vsyncpa [#allocation9], 0
    %s17 = scalar_lea.sflag [#allocation9], 1
    %18 = vsyncpa %s17, 0
    loop: start=0, step=1, limit=4
    $region2: #{tpu_custom_call.1} parent=1 // loop_pre_header
      _
    $region3: #{tpu_custom_call.1} parent=1 // loop_header
      %s20 = sphi 0, %s24
      %p21 = scmp.ge.s32.totalorder %s20, 4
      %s30 = sphi 0, %s32
      %s33 = sphi 0, %s30
      %s34 = sphi 0, %s33
      %s50 = sphi 0, %s34
      %s54 = sphi 0, %s54
      %s56 = sphi 0, %s54
      %s57 = sphi 0, %s56
      %s71 = sphi 0, %s57
      %s77 = sphi 0, %s79
      %s80 = sphi 0, %s77
      %s81 = sphi 0, %s80
      %s97 = sphi 0, %s81
      %s103 = sphi 0, %s105
      %s106 = sphi 0, %s103
      %s107 = sphi 0, %s106
      %s123 = sphi 0, %s107
    $region4: #{tpu_custom_call.1} parent=1 // loop_header_branch
      %23 = sbr.rel (%p21) target = $region8
    $region5: #{tpu_custom_call.1} parent=1 // loop_body
      %s25 = ssub.s32 %s20, 1
      %s26 = ssub.s32 %s20, 2
      %s27 = sadd.s32 %s20, 1
      %s28 = ssub.s32 %s20, %s27
      %p29 = scmp.eq.s32.totalorder %s28, 0
      %s31 = sadd.s32 %s30, 1
      %s32 = scalar_select %p29, %s30, %s31
      %p35 = pneg %p29
      %p36 = scmp.eq.s32.totalorder %s20, 1
      %p37 = por %p35, %p36
      %p38 = scmp.ne.s32.totalorder %s30, %s33
      %p39 = scmp.eq.s32.totalorder %s20, 0
      %p40 = por %p38, %p39
      %p41 = scmp.ne.s32.totalorder %s30, %s33
      %p42 = scmp.eq.s32.totalorder %s25, 1
      %p43 = por %p41, %p42
      %p44 = scmp.ne.s32.totalorder %s33, %s34
      %p45 = scmp.eq.s32.totalorder %s25, 0
      %p46 = por %p44, %p45
      %p47 = scmp.ne.s32.totalorder %s33, %s34
      %p48 = scmp.eq.s32.totalorder %s26, 1
      %p49 = por %p47, %p48
      %p51 = scmp.ne.s32.totalorder %s34, %s50
      %p52 = scmp.eq.s32.totalorder %s26, 0
      %p53 = por %p51, %p52
      %s55 = sadd.s32 %s54, 1
      %p58 = scmp.eq.s32.totalorder %s20, 1
      %p59 = scmp.ne.s32.totalorder %s54, %s56
      %p60 = scmp.eq.s32.totalorder %s20, 0
      %p61 = por %p59, %p60
      %p62 = scmp.ne.s32.totalorder %s54, %s56
      %p63 = scmp.eq.s32.totalorder %s25, 1
      %p64 = por %p62, %p63
      %p65 = scmp.ne.s32.totalorder %s56, %s57
      %p66 = scmp.eq.s32.totalorder %s25, 0
      %p67 = por %p65, %p66
      %p68 = scmp.ne.s32.totalorder %s56, %s57
      %p69 = scmp.eq.s32.totalorder %s26, 1
      %p70 = por %p68, %p69
      %p72 = scmp.ne.s32.totalorder %s57, %s71
      %p73 = scmp.eq.s32.totalorder %s26, 0
      %p74 = por %p72, %p73
      %s75 = ssub.s32 %s20, %s27
      %p76 = scmp.eq.s32.totalorder %s75, 0
      %s78 = sadd.s32 %s77, 1
      %s79 = scalar_select %p76, %s77, %s78
      %p82 = pneg %p76
      %p83 = scmp.eq.s32.totalorder %s20, 1
      %p84 = por %p82, %p83
      %p85 = scmp.ne.s32.totalorder %s77, %s80
      %p86 = scmp.eq.s32.totalorder %s20, 0
      %p87 = por %p85, %p86
      %p88 = scmp.ne.s32.totalorder %s77, %s80
      %p89 = scmp.eq.s32.totalorder %s25, 1
      %p90 = por %p88, %p89
      %p91 = scmp.ne.s32.totalorder %s80, %s81
      %p92 = scmp.eq.s32.totalorder %s25, 0
      %p93 = por %p91, %p92
      %p94 = scmp.ne.s32.totalorder %s80, %s81
      %p95 = scmp.eq.s32.totalorder %s26, 1
      %p96 = por %p94, %p95
      %p98 = scmp.ne.s32.totalorder %s81, %s97
      %p99 = scmp.eq.s32.totalorder %s26, 0
      %p100 = por %p98, %p99
      %s101 = ssub.s32 %s20, %s27
      %p102 = scmp.eq.s32.totalorder %s101, 0
      %s104 = sadd.s32 %s103, 1
      %s105 = scalar_select %p102, %s103, %s104
      %p108 = pneg %p102
      %p109 = scmp.eq.s32.totalorder %s20, 1
      %p110 = por %p108, %p109
      %p111 = scmp.ne.s32.totalorder %s103, %s106
      %p112 = scmp.eq.s32.totalorder %s20, 0
      %p113 = por %p111, %p112
      %p114 = scmp.ne.s32.totalorder %s103, %s106
      %p115 = scmp.eq.s32.totalorder %s25, 1
      %p116 = por %p114, %p115
      %p117 = scmp.ne.s32.totalorder %s106, %s107
      %p118 = scmp.eq.s32.totalorder %s25, 0
      %p119 = por %p117, %p118
      %p120 = scmp.ne.s32.totalorder %s106, %s107
      %p121 = scmp.eq.s32.totalorder %s26, 1
      %p122 = por %p120, %p121
      %p124 = scmp.ne.s32.totalorder %s107, %s123
      %p125 = scmp.eq.s32.totalorder %s26, 0
      %p126 = por %p124, %p125
      %p127 = scmp.le.s32.totalorder 1, %s20
      %p128 = scmp.lt.s32.totalorder %s20, 3
      %p129 = pnand %p127, %p128
      %p130 = pneg %p129
      // Predicated region
      $region9: #{tpu_custom_call.1} parent=5 // pred_check
        _
      $region10: #{tpu_custom_call.1} parent=5 // pred_check_branch
        %132 = sbr.rel (%p129) target = $region12
      $region11: #{tpu_custom_call.1} parent=5 // pred_region
        %s133 = ssub.s32 %s20, 1
        // Predicated region
        $region13: #{tpu_custom_call.1} parent=11 // pred_check
          %p134 = pneg %p67
        $region14: #{tpu_custom_call.1} parent=11 // pred_check_branch
          %136 = sbr.rel (%p134) target = $region16
        $region15: #{tpu_custom_call.1} parent=11 // pred_region
          %s138 = ssub.s32 6144, 6144
          %139 = vsyncadd [#allocation6], %s138
          %s140 = sshll.u32 [#allocation5], 4
          %s141 = int_to_ptr.vmem [resolvable:$true] %s140
          %146 = dma.hbm_to_vmem [thread:$0]  %s1, 6144, %s141, [#allocation6], 128, 128, 8
        $region16: #{tpu_custom_call.1} parent=11 // pred_fallthru
          _
      $region12: #{tpu_custom_call.1} parent=5 // pred_fallthru
        _
      %p147 = scmp.lt.s32.totalorder %s20, 2
      // Predicated region
      $region17: #{tpu_custom_call.1} parent=5 // pred_check
        %p148 = pneg %p147
      $region18: #{tpu_custom_call.1} parent=5 // pred_check_branch
        %150 = sbr.rel (%p148) target = $region20
      $region19: #{tpu_custom_call.1} parent=5 // pred_region
        // Predicated region
        $region21: #{tpu_custom_call.1} parent=19 // pred_check
          %p151 = pneg %p40
        $region22: #{tpu_custom_call.1} parent=19 // pred_check_branch
          %153 = sbr.rel (%p151) target = $region24
        $region23: #{tpu_custom_call.1} parent=19 // pred_region
          %s154 = sand.u32 %s30, 1
          %s155 = scalar_lea.sflag [#allocation3], %s154
          %s156 = sand.u32 %s30, 1
          %s157 = smul.addr %s156, 16
          %s158 = scalar_lea.vmem [#allocation2], %s157
          %s159 = smul.u32 2, %s20
          %s161 = ssub.s32 256, 256
          %162 = vsyncadd %s155, %s161
          %s163 = smul.addr %s159, 128
          %s164 = scalar_lea.hbm %s0, %s163
          %s165 = sshll.u32 %s158, 4
          %s166 = int_to_ptr.vmem [resolvable:$true] %s165
          %171 = dma.hbm_to_vmem [thread:$0]  %s164, 256, %s166, %s155, 128, 128, 8
        $region24: #{tpu_custom_call.1} parent=19 // pred_fallthru
          _
      $region20: #{tpu_custom_call.1} parent=5 // pred_fallthru
        _
      %p172 = scmp.le.s32.totalorder 1, %s20
      %p173 = scmp.lt.s32.totalorder %s20, 3
      %p174 = pnand %p172, %p173
      %p175 = pneg %p174
      // Predicated region
      $region25: #{tpu_custom_call.1} parent=5 // pred_check
        _
      $region26: #{tpu_custom_call.1} parent=5 // pred_check_branch
        %177 = sbr.rel (%p174) target = $region28
      $region27: #{tpu_custom_call.1} parent=5 // pred_region
        %s178 = ssub.s32 %s20, 1
        %s179 = sand.u32 %s33, 1
        %s180 = scalar_lea.sflag [#allocation3], %s179
        %s181 = sand.u32 %s33, 1
        %s182 = smul.addr %s181, 16
        %s183 = scalar_lea.vmem [#allocation2], %s182
        // Predicated region
        $region29: #{tpu_custom_call.1} parent=27 // pred_check
          %p184 = pneg %p46
        $region30: #{tpu_custom_call.1} parent=27 // pred_check_branch
          %186 = sbr.rel (%p184) target = $region32
        $region31: #{tpu_custom_call.1} parent=27 // pred_region
          %187 = dma.done %s180, 256
        $region32: #{tpu_custom_call.1} parent=27 // pred_fallthru
          _
        // Predicated region
        $region33: #{tpu_custom_call.1} parent=27 // pred_check
          %p188 = pneg %p67
        $region34: #{tpu_custom_call.1} parent=27 // pred_check_branch
          %190 = sbr.rel (%p188) target = $region36
        $region35: #{tpu_custom_call.1} parent=27 // pred_region
          %191 = dma.done [#allocation6], 6144
        $region36: #{tpu_custom_call.1} parent=27 // pred_fallthru
          _
        %s192 = sand.u32 %s33, 1
        %s193 = scalar_lea.sflag [#allocation3], %s192
        %s194 = sand.u32 %s33, 1
        %s195 = smul.addr %s194, 16
        %s196 = scalar_lea.vmem [#allocation2], %s195
        %p197 = pneg %p46
        %p198 = pneg %p43
        %p199 = pneg %p67
        %p200 = pneg %p64
        %p201 = pneg %p93
        %p202 = pneg %p90
        %s203 = sand.u32 %s80, 1
        %s204 = scalar_lea.sflag [#allocation4], %s203
        %s205 = sand.u32 %s80, 1
        %s206 = smul.addr %s205, 16
        %s207 = scalar_lea.vmem [#allocation7], %s206
        %p208 = pneg %p119
        %p209 = pneg %p116
        %s210 = sand.u32 %s106, 1
        %s211 = scalar_lea.sflag [#allocation9], %s210
        %s212 = sand.u32 %s106, 1
        %s213 = smul.addr %s212, 2
        %s214 = scalar_lea.vmem [#allocation8], %s213
        %s215 = smul.u32 2, %s25
        %s216 = smul.u32 2, %s25
        %v217 = vld [vmem:[%s183] sm:$0xff]
        %v218 = vld [vmem:[%s183 + $0x8] sm:$0xff]
        %v219 = vlaneseq
        %v220 = vshrl.u32 %v219, 7
        %v221 = vadd.s32 %v220, 8
        %vm222 = vcmp.lt.s32.totalorder %v220, 0
        %v223 = vsub.s32 0, %v220
        %v224 = vsel %vm222, %v223, %v220
        %v225 = vshrl.u32 %v224, 4
        %v226 = vand.u32 %v224, 15
        %v227 = vsub.s32 0, %v226
        %v228 = vsel %vm222, %v227, %v226
        %vm229 = vcmp.lt.s32.totalorder %v221, 0
        %v230 = vsub.s32 0, %v221
        %v231 = vsel %vm229, %v230, %v221
        %v232 = vshrl.u32 %v231, 4
        %v233 = vand.u32 %v231, 15
        %v234 = vsub.s32 0, %v233
        %v235 = vsel %vm229, %v234, %v233
        %vm236 = vcmp.ne.s32.totalorder %v228, 0
        %vm237 = vcmp.ne.s32.totalorder %v235, 0
        %vm238 = vcmp.lt.s32.totalorder %v228, 0
        %vm239 = vcmp.lt.s32.totalorder %v235, 0
        %vm240 = vmand %vm238, %vm236
        %vm241 = vmand %vm239, %vm237
        %v242 = vadd.s32 %v228, 16
        %v243 = vadd.s32 %v235, 16
        %v244 = vsel %vm240, %v242, %v228
        %v245 = vsel %vm241, %v243, %v235
        %v246 = vadd.s32 %v244, 4294967295
        %v247 = vadd.s32 %v245, 4294967295
        %vm248 = vcmp.ge.s32.totalorder %v246, 0
        %vm249 = vcmp.ge.s32.totalorder %v247, 0
        %vm250 = vcmp.lt.s32.totalorder %v246, 16
        %vm251 = vcmp.lt.s32.totalorder %v247, 16
        %vm252 = vmand %vm248, %vm250
        %vm253 = vmand %vm249, %vm251
        %v254 = vrot.slane %v217, 7
        %v255 = vrot.slane %v218, 7
        %vm256 = vcmp.lt.s32.totalorder %v220, 1
        %v257 = vsel %vm256, %v254, %v255
        %v258 = vsel %vm256, %v255, %v254
        %v259 = vsel %vm252, %v258, 0.0
        %v260 = vsel %vm253, %v257, 0.0
        %v261 = vld [vmem:[#allocation5] sm:$0xff]
        %v262 = vld [vmem:[#allocation5 + $0x8] sm:$0xff]
        %v263 = vld [vmem:[#allocation5 + $0x10] sm:$0xff]
        %v264 = vld [vmem:[#allocation5 + $0x18] sm:$0xff]
        %v265 = vld [vmem:[#allocation5 + $0x20] sm:$0xff]
        %v266 = vld [vmem:[#allocation5 + $0x28] sm:$0xff]
        %v267 = vld [vmem:[#allocation5 + $0x30] sm:$0xff]
        %v268 = vld [vmem:[#allocation5 + $0x38] sm:$0xff]
        %v269 = vld [vmem:[#allocation5 + $0x40] sm:$0xff]
        %v270 = vld [vmem:[#allocation5 + $0x48] sm:$0xff]
        %v271 = vld [vmem:[#allocation5 + $0x50] sm:$0xff]
        %v272 = vld [vmem:[#allocation5 + $0x58] sm:$0xff]
        %v273 = vld [vmem:[#allocation5 + $0x60] sm:$0xff]
        %v274 = vld [vmem:[#allocation5 + $0x68] sm:$0xff]
        %v275 = vld [vmem:[#allocation5 + $0x70] sm:$0xff]
        %v276 = vld [vmem:[#allocation5 + $0x78] sm:$0xff]
        %s277 = scalar_lea.vmem [#allocation5], 128
        %v278 = vld [vmem:[%s277] sm:$0xff]
        %v279 = vld [vmem:[%s277 + $0x8] sm:$0xff]
        %v280 = vld [vmem:[%s277 + $0x10] sm:$0xff]
        %v281 = vld [vmem:[%s277 + $0x18] sm:$0xff]
        %v282 = vld [vmem:[%s277 + $0x20] sm:$0xff]
        %v283 = vld [vmem:[%s277 + $0x28] sm:$0xff]
        %v284 = vld [vmem:[%s277 + $0x30] sm:$0xff]
        %v285 = vld [vmem:[%s277 + $0x38] sm:$0xff]
        %v286 = vld [vmem:[%s277 + $0x40] sm:$0xff]
        %v287 = vld [vmem:[%s277 + $0x48] sm:$0xff]
        %v288 = vld [vmem:[%s277 + $0x50] sm:$0xff]
        %v289 = vld [vmem:[%s277 + $0x58] sm:$0xff]
        %v290 = vld [vmem:[%s277 + $0x60] sm:$0xff]
        %v291 = vld [vmem:[%s277 + $0x68] sm:$0xff]
        %v292 = vld [vmem:[%s277 + $0x70] sm:$0xff]
        %v293 = vld [vmem:[%s277 + $0x78] sm:$0xff]
        %294 = vmatprep.subr.mxu0 0.0
        %295 = vmatpush1.msra.mxu0 %v278
        %296 = vmatprep.subr.mxu0 0.0
        %297 = vmatpush1.msra.mxu0 %v279
        %298 = vmatprep.subr.mxu0 0.0
        %299 = vmatpush1.msra.mxu0 %v280
        %300 = vmatprep.subr.mxu0 0.0
        %301 = vmatpush1.msra.mxu0 %v281
        %302 = vmatprep.subr.mxu0 0.0
        %303 = vmatpush1.msra.mxu0 %v282
        %304 = vmatprep.subr.mxu0 0.0
        %305 = vmatpush1.msra.mxu0 %v283
        %306 = vmatprep.subr.mxu0 0.0
        %307 = vmatpush1.msra.mxu0 %v284
        %308 = vmatprep.subr.mxu0 0.0
        %309 = vmatpush1.msra.mxu0 %v285
        %310 = vmatprep.subr.mxu0 0.0
        %311 = vmatpush1.msra.mxu0 %v286
        %312 = vmatprep.subr.mxu0 0.0
        %313 = vmatpush1.msra.mxu0 %v287
        %314 = vmatprep.subr.mxu0 0.0
        %315 = vmatpush1.msra.mxu0 %v288
        %316 = vmatprep.subr.mxu0 0.0
        %317 = vmatpush1.msra.mxu0 %v289
        %318 = vmatprep.subr.mxu0 0.0
        %319 = vmatpush1.msra.mxu0 %v290
        %320 = vmatprep.subr.mxu0 0.0
        %321 = vmatpush1.msra.mxu0 %v291
        %322 = vmatprep.subr.mxu0 0.0
        %323 = vmatpush1.msra.mxu0 %v292
        %324 = vmatprep.subr.mxu0 0.0
        %325 = vmatpush1.msra.mxu0 %v293
        %326 = vmatprep.subr.mxu0 0.0
        %327 = vmatpush1.msra.mxu0 0.0
        %328 = vmatprep.subr.mxu0 0.0
        %329 = vmatpush1.msra.mxu0 0.0
        %330 = vmatprep.subr.mxu0 0.0
        %331 = vmatpush1.msra.mxu0 0.0
        %332 = vmatprep.subr.mxu0 0.0
        %333 = vmatpush1.msra.mxu0 0.0
        %334 = vmatprep.subr.mxu0 0.0
        %335 = vmatpush1.msra.mxu0 0.0
        %336 = vmatprep.subr.mxu0 0.0
        %337 = vmatpush1.msra.mxu0 0.0
        %338 = vmatprep.subr.mxu0 0.0
        %339 = vmatpush1.msra.mxu0 0.0
        %340 = vmatprep.subr.mxu0 0.0
        %341 = vmatpush1.msra.mxu0 0.0
        %342 = vmatprep.subr.mxu0 0.0
        %343 = vmatpush1.msra.mxu0 0.0
        %344 = vmatprep.subr.mxu0 0.0
        %345 = vmatpush1.msra.mxu0 0.0
        %346 = vmatprep.subr.mxu0 0.0
        %347 = vmatpush1.msra.mxu0 0.0
        %348 = vmatprep.subr.mxu0 0.0
        %349 = vmatpush1.msra.mxu0 0.0
        %350 = vmatprep.subr.mxu0 0.0
        %351 = vmatpush1.msra.mxu0 0.0
        %352 = vmatprep.subr.mxu0 0.0
        %353 = vmatpush1.msra.mxu0 0.0
        %354 = vmatprep.subr.mxu0 0.0
        %355 = vmatpush1.msra.mxu0 0.0
        %356 = vmatprep.subr.mxu0 0.0
        %357 = vmatpush1.msra.mxu0 0.0
        %358 = vmatprep.mubr.f32.mxu0 0.0
        %359 = vmatmul.mubr.f32.gmra.mrb[0].mxu0 %v217
        %v360 = vpop.f32.mrb[0].mxu0
        %v361 = vadd.f32 0.0, %v360
        %v362 = vpop.f32.mrb[0].mxu0
        %363 = vmatprep.mubr.f32.mxu0 0.0
        %364 = vmatmul.mubr.f32.gmra.mrb[0].mxu0 %v218
        %v365 = vpop.f32.mrb[0].mxu0
        %v366 = vadd.f32 0.0, %v365
        %v367 = vpop.f32.mrb[0].mxu0
        %368 = vdwg.mxu0
        %369 = vmatprep.subr.mxu0 0.0
        %370 = vmatpush1.msra.mxu0 %v261
        %371 = vmatprep.subr.mxu0 0.0
        %372 = vmatpush1.msra.mxu0 %v262
        %373 = vmatprep.subr.mxu0 0.0
        %374 = vmatpush1.msra.mxu0 %v263
        %375 = vmatprep.subr.mxu0 0.0
        %376 = vmatpush1.msra.mxu0 %v264
        %377 = vmatprep.subr.mxu0 0.0
        %378 = vmatpush1.msra.mxu0 %v265
        %379 = vmatprep.subr.mxu0 0.0
        %380 = vmatpush1.msra.mxu0 %v266
        %381 = vmatprep.subr.mxu0 0.0
        %382 = vmatpush1.msra.mxu0 %v267
        %383 = vmatprep.subr.mxu0 0.0
        %384 = vmatpush1.msra.mxu0 %v268
        %385 = vmatprep.subr.mxu0 0.0
        %386 = vmatpush1.msra.mxu0 %v269
        %387 = vmatprep.subr.mxu0 0.0
        %388 = vmatpush1.msra.mxu0 %v270
        %389 = vmatprep.subr.mxu0 0.0
        %390 = vmatpush1.msra.mxu0 %v271
        %391 = vmatprep.subr.mxu0 0.0
        %392 = vmatpush1.msra.mxu0 %v272
        %393 = vmatprep.subr.mxu0 0.0
        %394 = vmatpush1.msra.mxu0 %v273
        %395 = vmatprep.subr.mxu0 0.0
        %396 = vmatpush1.msra.mxu0 %v274
        %397 = vmatprep.subr.mxu0 0.0
        %398 = vmatpush1.msra.mxu0 %v275
        %399 = vmatprep.subr.mxu0 0.0
        %400 = vmatpush1.msra.mxu0 %v276
        %401 = vmatprep.subr.mxu0 0.0
        %402 = vmatpush1.msra.mxu0 0.0
        %403 = vmatprep.subr.mxu0 0.0
        %404 = vmatpush1.msra.mxu0 0.0
        %405 = vmatprep.subr.mxu0 0.0
        %406 = vmatpush1.msra.mxu0 0.0
        %407 = vmatprep.subr.mxu0 0.0
        %408 = vmatpush1.msra.mxu0 0.0
        %409 = vmatprep.subr.mxu0 0.0
        %410 = vmatpush1.msra.mxu0 0.0
        %411 = vmatprep.subr.mxu0 0.0
        %412 = vmatpush1.msra.mxu0 0.0
        %413 = vmatprep.subr.mxu0 0.0
        %414 = vmatpush1.msra.mxu0 0.0
        %415 = vmatprep.subr.mxu0 0.0
        %416 = vmatpush1.msra.mxu0 0.0
        %417 = vmatprep.subr.mxu0 0.0
        %418 = vmatpush1.msra.mxu0 0.0
        %419 = vmatprep.subr.mxu0 0.0
        %420 = vmatpush1.msra.mxu0 0.0
        %421 = vmatprep.subr.mxu0 0.0
        %422 = vmatpush1.msra.mxu0 0.0
        %423 = vmatprep.subr.mxu0 0.0
        %424 = vmatpush1.msra.mxu0 0.0
        %425 = vmatprep.subr.mxu0 0.0
        %426 = vmatpush1.msra.mxu0 0.0
        %427 = vmatprep.subr.mxu0 0.0
        %428 = vmatpush1.msra.mxu0 0.0
        %429 = vmatprep.subr.mxu0 0.0
        %430 = vmatpush1.msra.mxu0 0.0
        %431 = vmatprep.subr.mxu0 0.0
        %432 = vmatpush1.msra.mxu0 0.0
        %433 = vmatprep.mubr.f32.mxu0 0.0
        %434 = vmatmul.mubr.f32.gmra.mrb[0].mxu0 %v259
        %v435 = vpop.f32.mrb[0].mxu0
        %v436 = vadd.f32 %v361, %v435
        %v437 = vpop.f32.mrb[0].mxu0
        %438 = vmatprep.mubr.f32.mxu0 0.0
        %439 = vmatmul.mubr.f32.gmra.mrb[0].mxu0 %v260
        %v440 = vpop.f32.mrb[0].mxu0
        %v441 = vadd.f32 %v366, %v440
        %v442 = vpop.f32.mrb[0].mxu0
        %443 = vdwg.mxu0
        %v444 = vadd.s32 %v244, 1
        %v445 = vadd.s32 %v245, 1
        %vm446 = vcmp.ge.s32.totalorder %v444, 0
        %vm447 = vcmp.ge.s32.totalorder %v445, 0
        %vm448 = vcmp.lt.s32.totalorder %v444, 16
        %vm449 = vcmp.lt.s32.totalorder %v445, 16
        %vm450 = vmand %vm446, %vm448
        %vm451 = vmand %vm447, %vm449
        %v452 = vrot.slane %v217, 1
        %v453 = vrot.slane %v218, 1
        %vm454 = vcmp.lt.s32.totalorder %v220, 7
        %v455 = vsel %vm454, %v452, %v453
        %v456 = vsel %vm454, %v453, %v452
        %v457 = vsel %vm450, %v455, 0.0
        %v458 = vsel %vm451, %v456, 0.0
        %s459 = scalar_lea.vmem [#allocation5], 256
        %v460 = vld [vmem:[%s459] sm:$0xff]
        %v461 = vld [vmem:[%s459 + $0x8] sm:$0xff]
        %v462 = vld [vmem:[%s459 + $0x10] sm:$0xff]
        %v463 = vld [vmem:[%s459 + $0x18] sm:$0xff]
        %v464 = vld [vmem:[%s459 + $0x20] sm:$0xff]
        %v465 = vld [vmem:[%s459 + $0x28] sm:$0xff]
        %v466 = vld [vmem:[%s459 + $0x30] sm:$0xff]
        %v467 = vld [vmem:[%s459 + $0x38] sm:$0xff]
        %v468 = vld [vmem:[%s459 + $0x40] sm:$0xff]
        %v469 = vld [vmem:[%s459 + $0x48] sm:$0xff]
        %v470 = vld [vmem:[%s459 + $0x50] sm:$0xff]
        %v471 = vld [vmem:[%s459 + $0x58] sm:$0xff]
        %v472 = vld [vmem:[%s459 + $0x60] sm:$0xff]
        %v473 = vld [vmem:[%s459 + $0x68] sm:$0xff]
        %v474 = vld [vmem:[%s459 + $0x70] sm:$0xff]
        %v475 = vld [vmem:[%s459 + $0x78] sm:$0xff]
        %476 = vmatprep.subr.mxu0 0.0
        %477 = vmatpush1.msra.mxu0 %v460
        %478 = vmatprep.subr.mxu0 0.0
        %479 = vmatpush1.msra.mxu0 %v461
        %480 = vmatprep.subr.mxu0 0.0
        %481 = vmatpush1.msra.mxu0 %v462
        %482 = vmatprep.subr.mxu0 0.0
        %483 = vmatpush1.msra.mxu0 %v463
        %484 = vmatprep.subr.mxu0 0.0
        %485 = vmatpush1.msra.mxu0 %v464
        %486 = vmatprep.subr.mxu0 0.0
        %487 = vmatpush1.msra.mxu0 %v465
        %488 = vmatprep.subr.mxu0 0.0
        %489 = vmatpush1.msra.mxu0 %v466
        %490 = vmatprep.subr.mxu0 0.0
        %491 = vmatpush1.msra.mxu0 %v467
        %492 = vmatprep.subr.mxu0 0.0
        %493 = vmatpush1.msra.mxu0 %v468
        %494 = vmatprep.subr.mxu0 0.0
        %495 = vmatpush1.msra.mxu0 %v469
        %496 = vmatprep.subr.mxu0 0.0
        %497 = vmatpush1.msra.mxu0 %v470
        %498 = vmatprep.subr.mxu0 0.0
        %499 = vmatpush1.msra.mxu0 %v471
        %500 = vmatprep.subr.mxu0 0.0
        %501 = vmatpush1.msra.mxu0 %v472
        %502 = vmatprep.subr.mxu0 0.0
        %503 = vmatpush1.msra.mxu0 %v473
        %504 = vmatprep.subr.mxu0 0.0
        %505 = vmatpush1.msra.mxu0 %v474
        %506 = vmatprep.subr.mxu0 0.0
        %507 = vmatpush1.msra.mxu0 %v475
        %508 = vmatprep.subr.mxu0 0.0
        %509 = vmatpush1.msra.mxu0 0.0
        %510 = vmatprep.subr.mxu0 0.0
        %511 = vmatpush1.msra.mxu0 0.0
        %512 = vmatprep.subr.mxu0 0.0
        %513 = vmatpush1.msra.mxu0 0.0
        %514 = vmatprep.subr.mxu0 0.0
        %515 = vmatpush1.msra.mxu0 0.0
        %516 = vmatprep.subr.mxu0 0.0
        %517 = vmatpush1.msra.mxu0 0.0
        %518 = vmatprep.subr.mxu0 0.0
        %519 = vmatpush1.msra.mxu0 0.0
        %520 = vmatprep.subr.mxu0 0.0
        %521 = vmatpush1.msra.mxu0 0.0
        %522 = vmatprep.subr.mxu0 0.0
        %523 = vmatpush1.msra.mxu0 0.0
        %524 = vmatprep.subr.mxu0 0.0
        %525 = vmatpush1.msra.mxu0 0.0
        %526 = vmatprep.subr.mxu0 0.0
        %527 = vmatpush1.msra.mxu0 0.0
        %528 = vmatprep.subr.mxu0 0.0
        %529 = vmatpush1.msra.mxu0 0.0
        %530 = vmatprep.subr.mxu0 0.0
        %531 = vmatpush1.msra.mxu0 0.0
        %532 = vmatprep.subr.mxu0 0.0
        %533 = vmatpush1.msra.mxu0 0.0
        %534 = vmatprep.subr.mxu0 0.0
        %535 = vmatpush1.msra.mxu0 0.0
        %536 = vmatprep.subr.mxu0 0.0
        %537 = vmatpush1.msra.mxu0 0.0
        %538 = vmatprep.subr.mxu0 0.0
        %539 = vmatpush1.msra.mxu0 0.0
        %540 = vmatprep.mubr.f32.mxu0 0.0
        %541 = vmatmul.mubr.f32.gmra.mrb[0].mxu0 %v457
        %v542 = vpop.f32.mrb[0].mxu0
        %v543 = vadd.f32 0.0, %v542
        %v544 = vpop.f32.mrb[0].mxu0
        %545 = vmatprep.mubr.f32.mxu0 0.0
        %546 = vmatmul.mubr.f32.gmra.mrb[0].mxu0 %v458
        %v547 = vpop.f32.mrb[0].mxu0
        %v548 = vadd.f32 0.0, %v547
        %v549 = vpop.f32.mrb[0].mxu0
        %550 = vdwg.mxu0
        %v551 = vadd.f32 %v436, %v543
        %v552 = vadd.f32 %v441, %v548
        %553 = vst [vmem:[%s207] sm:$0xff] %v551
        %554 = vst [vmem:[%s207 + $0x8] sm:$0xff] %v552
        %v555 = vadd.f32 %v551, %v552
        %v556 = vrot.slane %v555, 4
        %v557 = vadd.f32 %v555, %v556
        %v558 = vrot.slane %v557, 2
        %v559 = vadd.f32 %v557, %v558
        %v560 = vrot.slane %v559, 1
        %v561 = vadd.f32 %v559, %v560
        %v562 = vmul.f32 %v551, %v551
        %v563 = vmul.f32 %v552, %v552
        %v564 = vadd.f32 %v562, %v563
        %v565 = vrot.slane %v564, 4
        %v566 = vadd.f32 %v564, %v565
        %v567 = vrot.slane %v566, 2
        %v568 = vadd.f32 %v566, %v567
        %v569 = vrot.slane %v568, 1
        %v570 = vadd.f32 %v568, %v569
        %vm571 = vcmask 1040384
        %v572 = vsel %vm571, %v561, %v570
        %573 = vst [vmem:[%s214] sm:$0x3] %v572
        %s574 = sand.u32 %s80, 1
        %s575 = scalar_lea.sflag [#allocation4], %s574
        %s576 = sand.u32 %s80, 1
        %s577 = smul.addr %s576, 16
        %s578 = scalar_lea.vmem [#allocation7], %s577
        %s579 = sand.u32 %s106, 1
        %s580 = scalar_lea.sflag [#allocation9], %s579
        %s581 = sand.u32 %s106, 1
        %s582 = smul.addr %s581, 2
        %s583 = scalar_lea.vmem [#allocation8], %s582
        // Predicated region
        $region37: #{tpu_custom_call.1} parent=27 // pred_check
          %p584 = pneg %p90
        $region38: #{tpu_custom_call.1} parent=27 // pred_check_branch
          %586 = sbr.rel (%p584) target = $region40
        $region39: #{tpu_custom_call.1} parent=27 // pred_region
          %s587 = smul.u32 2, %s25
          %s589 = ssub.s32 256, 256
          %590 = vsyncadd %s575, %s589
          %s591 = smul.addr %s587, 128
          %s592 = scalar_lea.hbm %s2, %s591
          %s593 = sshll.u32 %s578, 4
          %s594 = int_to_ptr.vmem [resolvable:$true] %s593
          %599 = dma.vmem_to_hbm [thread:$0]  %s594, 256, %s592, %s575, 128, 128, 8
        $region40: #{tpu_custom_call.1} parent=27 // pred_fallthru
          _
        // Predicated region
        $region41: #{tpu_custom_call.1} parent=27 // pred_check
          %p600 = pneg %p116
        $region42: #{tpu_custom_call.1} parent=27 // pred_check_branch
          %602 = sbr.rel (%p600) target = $region44
        $region43: #{tpu_custom_call.1} parent=27 // pred_region
          %s604 = ssub.s32 32, 32
          %605 = vsyncadd %s580, %s604
          %s606 = smul.addr %s25, 32
          %s607 = scalar_lea.hbm %s3, %s606
          %s609 = sshll.u32 %s583, 4
          %s610 = int_to_ptr.vmem [resolvable:$true] %s609
          %612 = dma.vmem_to_hbm [thread:$0]  %s610, 32, %s607, %s580
        $region44: #{tpu_custom_call.1} parent=27 // pred_fallthru
          _
      $region28: #{tpu_custom_call.1} parent=5 // pred_fallthru
        _
      %p613 = scmp.le.s32.totalorder 2, %s20
      // Predicated region
      $region45: #{tpu_custom_call.1} parent=5 // pred_check
        %p614 = pneg %p613
      $region46: #{tpu_custom_call.1} parent=5 // pred_check_branch
        %616 = sbr.rel (%p614) target = $region48
      $region47: #{tpu_custom_call.1} parent=5 // pred_region
        %s617 = ssub.s32 %s20, 2
        // Predicated region
        $region49: #{tpu_custom_call.1} parent=47 // pred_check
          %p618 = pneg %p96
        $region50: #{tpu_custom_call.1} parent=47 // pred_check_branch
          %620 = sbr.rel (%p618) target = $region52
        $region51: #{tpu_custom_call.1} parent=47 // pred_region
          %s621 = sand.u32 %s81, 1
          %s622 = scalar_lea.sflag [#allocation4], %s621
          %s623 = sand.u32 %s81, 1
          %s624 = smul.addr %s623, 16
          %s625 = scalar_lea.vmem [#allocation7], %s624
          %626 = dma.done %s622, 256
        $region52: #{tpu_custom_call.1} parent=47 // pred_fallthru
          _
        // Predicated region
        $region53: #{tpu_custom_call.1} parent=47 // pred_check
          %p627 = pneg %p122
        $region54: #{tpu_custom_call.1} parent=47 // pred_check_branch
          %629 = sbr.rel (%p627) target = $region56
        $region55: #{tpu_custom_call.1} parent=47 // pred_region
          %s630 = sand.u32 %s107, 1
          %s631 = scalar_lea.sflag [#allocation9], %s630
          %s632 = sand.u32 %s107, 1
          %s633 = smul.addr %s632, 2
          %s634 = scalar_lea.vmem [#allocation8], %s633
          %635 = dma.done %s631, 32
        $region56: #{tpu_custom_call.1} parent=47 // pred_fallthru
          _
      $region48: #{tpu_custom_call.1} parent=5 // pred_fallthru
        _
    $region6: #{tpu_custom_call.1} parent=1 // loop_footer
      %s24 = sadd.s32 1, %s20
    $region7: #{tpu_custom_call.1} parent=1 // loop_footer_branch
      %19 = sbr.rel target = $region3
    $region8: #{tpu_custom_call.1} parent=1 // loop_exit
      _
    %636 = vsyncpa [#allocation3], 1
    %s637 = scalar_lea.sflag [#allocation3], 1
    %638 = vsyncpa %s637, 1
    %639 = vsyncpa [#allocation6], 1
    %640 = vsyncpa [#allocation4], 1
    %s641 = scalar_lea.sflag [#allocation4], 1
    %642 = vsyncpa %s641, 1
    %643 = vsyncpa [#allocation9], 1
    %s644 = scalar_lea.sflag [#allocation9], 1
    %645 = vsyncpa %s644, 1

</llo_original>
